<compile_context>
chip_gen: v7x
topology: tpu7x:2x2x1
jax: 0.10.0
libtpu: 0.0.40
codegen_flags: <defaults>
</compile_context>

<pallas_src>
import functools

import jax
import jax.numpy as jnp
from jax import lax
from jax.experimental import pallas as pl
from jax.experimental.pallas import tpu as pltpu

LOGIT_SCALE = 20.0


def _round_up(x, m):
    return ((x + m - 1) // m) * m


def _pick_tile(b, candidates):
    """Largest candidate that divides b (b is always a multiple of 128)."""
    for c in candidates:
        if b % c == 0:
            return c
    raise ValueError(f"no tile candidate divides {b}")


def _tile_partial_sum(elem, tm, tn):
    """(tm, tn) f32 -> (8, 128) f32 partial sum, (8,128)-tile aligned.

    Step 1 splits the sublane axis at an 8-row boundary (layout-preserving
    reshape) and reduces across vreg groups (pure VPU adds).  Step 2 folds the
    lane groups with static lane-aligned slices (<= 4 adds, no XLU shuffles).
    """
    col = elem.reshape(tm // 8, 8, tn).sum(axis=0)          # (8, tn)
    part = col[:, 0:128]
    for c in range(1, tn // 128):
        part = part + col[:, c * 128:(c + 1) * 128]
    return part                                              # (8, 128)


def _spu_loss_kernel(img_ref, txt_ref, col_ref, row_ref, out_ref, *,
                     b_valid, padded):
    i = pl.program_id(0)
    j = pl.program_id(1)
    tm = img_ref.shape[0]
    tn = txt_ref.shape[1]

    # Output block (per i-row of tiles) is resident across the j (reduction)
    # axis: zero-init on the first j step, accumulate afterwards.
    @pl.when(j == 0)
    def _init():
        out_ref[...] = jnp.zeros_like(out_ref)

    # Natural (m,k)@(k,n) matmul (text transposed once in the wrapper), bf16
    # operands with f32 accumulation.  Scale the f32 logits tile post-dot so
    # the resident image operand is never re-scaled / re-rounded per j step.
    logits = lax.dot_general(
        img_ref[...], txt_ref[...],
        dimension_numbers=(((1,), (0,)), ((), ())),
        preferred_element_type=jnp.float32,
    ) * jnp.float32(LOGIT_SCALE)                              # (tm, tn) f32

    # Fused ground truth: "- x*gt" -> "- where(same_id, x, 0)" (one select).
    same = col_ref[...] == row_ref[...]                       # (tm,1)==(1,tn)

    # Numerically-stable BCE-with-logits: max(x,0) - x*y + log1p(exp(-|x|)).
    elem = (jnp.maximum(logits, 0.0)
            - jnp.where(same, logits, 0.0)
            + jnp.log1p(jnp.exp(-jnp.abs(logits))))

    if not padded:
        out_ref[...] += _tile_partial_sum(elem, tm, tn)
    else:
        # Only boundary tiles pay for the iota mask; interior tiles take the
        # unmasked fast path.  Padded rows/cols hold zero embeddings, so every
        # masked-out element is finite (== log 2) before being zeroed.
        row0 = i * tm
        col0 = j * tn
        boundary = jnp.logical_or(row0 + tm > b_valid, col0 + tn > b_valid)

        @pl.when(jnp.logical_not(boundary))
        def _fast():
            out_ref[...] += _tile_partial_sum(elem, tm, tn)

        @pl.when(boundary)
        def _masked():
            rid = row0 + lax.broadcasted_iota(jnp.int32, (tm, tn), 0)
            cid = col0 + lax.broadcasted_iota(jnp.int32, (tm, tn), 1)
            keep = jnp.logical_and(rid < b_valid, cid < b_valid)
            out_ref[...] += _tile_partial_sum(
                jnp.where(keep, elem, 0.0), tm, tn)


def spu_relevance_loss(image_emb, text_emb, spu_ids, *, tm=None, tn=None,
                       compute_dtype=jnp.bfloat16):
    """image_emb, text_emb: (B, D) float.  spu_ids: (B,) integer ids."""
    B, D = image_emb.shape
    assert text_emb.shape == (B, D)

    # Pad B up to an MXU/lane friendly multiple; padded rows/cols are masked
    # in-kernel (avoids the old huge full-B fallback block -> VMEM OOM risk).
    align = 128 if B <= 128 else 256
    B_pad = _round_up(B, align)

    # bf16 MXU path by default; exact int32 label comparison either way.
    img = image_emb.astype(compute_dtype)
    txt_t = text_emb.astype(compute_dtype).T          # (D, B): transpose ONCE
    labels = spu_ids.astype(jnp.int32)

    if B_pad != B:
        img = jnp.pad(img, ((0, B_pad - B), (0, 0)))
        txt_t = jnp.pad(txt_t, ((0, 0), (0, B_pad - B)))
        labels = jnp.pad(labels, (0, B_pad - B))
    lab_col = labels.reshape(B_pad, 1)
    lab_row = labels.reshape(1, B_pad)

    # Big tiles -> few grid steps and less text re-streaming; caps keep blocks
    # comfortably inside the v7x 64 MiB physical VMEM (binding generation).
    itemsize = jnp.dtype(compute_dtype).itemsize
    if tm is None:
        tm = _pick_tile(B_pad, (1024, 512, 256, 128))
        while tm > 128 and tm * D * itemsize > (4 << 20):
            tm //= 2
    if tn is None:
        tn = _pick_tile(B_pad, (512, 256, 128))
        while tn > 128 and tn * D * itemsize > (2 << 20):
            tn //= 2
    assert B_pad % tm == 0 and B_pad % tn == 0
    assert tm % 8 == 0 and tn % 128 == 0
    n_i, n_j = B_pad // tm, B_pad // tn

    kernel = functools.partial(_spu_loss_kernel, b_valid=B,
                               padded=(B_pad != B))

    partials = pl.pallas_call(
        kernel,
        out_shape=jax.ShapeDtypeStruct((n_i * 8, 128), jnp.float32),
        grid_spec=pltpu.PrefetchScalarGridSpec(
            num_scalar_prefetch=0,
            grid=(n_i, n_j),                           # reduction axis (j) last
            in_specs=[
                pl.BlockSpec((tm, D), lambda i, j: (i, 0)),   # image rows
                pl.BlockSpec((D, tn), lambda i, j: (0, j)),   # text cols (pre-T)
                pl.BlockSpec((tm, 1), lambda i, j: (i, 0)),   # labels (rows)
                pl.BlockSpec((1, tn), lambda i, j: (0, j)),   # labels (cols)
            ],
            out_specs=pl.BlockSpec((8, 128), lambda i, j: (i, 0)),
        ),
        compiler_params=pltpu.CompilerParams(
            dimension_semantics=("parallel", "arbitrary"),
            vmem_limit_bytes=48 * 1024 * 1024,
        ),
    )(img, txt_t, lab_col, lab_row)

    # Symmetry: loss_txt == loss_img, so (loss_img + loss_txt) / 2 == loss_img.
    return jnp.sum(partials) / jnp.float32(B * B)


def _reference_loss(image_emb, text_emb, spu_ids):
    """Pure-JAX reference mirroring the PyTorch forward (both BCE passes)."""
    img = image_emb.astype(jnp.float32)
    txt = text_emb.astype(jnp.float32)
    li = LOGIT_SCALE * img @ txt.T
    lt = LOGIT_SCALE * txt @ img.T
    lab = spu_ids.astype(jnp.int32)
    gt = (lab[:, None] == lab[None, :]).astype(jnp.float32)

    def bce(x, y):
        return jnp.mean(jnp.maximum(x, 0.0) - x * y
                        + jnp.log1p(jnp.exp(-jnp.abs(x))))

    return 0.5 * (bce(li, gt) + bce(lt, gt))


if __name__ == "__main__":
    # --- 1) tiny batch: pads 8 -> 128, exercises the masked boundary path,
    #        exact f32 compute path vs f32 reference. ---
    B, D = 8, 128
    k1, k2, k3 = jax.random.split(jax.random.PRNGKey(0), 3)
    img = jax.random.normal(k1, (B, D), jnp.float32)
    txt = jax.random.normal(k2, (B, D), jnp.float32)
    img = img / jnp.linalg.norm(img, axis=-1, keepdims=True)
    txt = txt / jnp.linalg.norm(txt, axis=-1, keepdims=True)
    ids = jax.random.randint(k3, (B,), 0, 4, dtype=jnp.int32)

    loss = jax.block_until_ready(
        spu_relevance_loss(img, txt, ids, compute_dtype=jnp.float32))
    ref = _reference_loss(img, txt, ids)
    assert jnp.allclose(loss, ref, rtol=1e-5, atol=1e-5), (loss, ref)

    # --- 2) multi-tile grid, default bf16 MXU path (reference is fed the same
    #        bf16-quantized embeddings to isolate kernel error). ---
    B2, D2 = 256, 64
    k4, k5, k6 = jax.random.split(jax.random.PRNGKey(1), 3)
    img2 = jax.random.normal(k4, (B2, D2), jnp.float32)
    txt2 = jax.random.normal(k5, (B2, D2), jnp.float32)
    img2 = img2 / jnp.linalg.norm(img2, axis=-1, keepdims=True)
    txt2 = txt2 / jnp.linalg.norm(txt2, axis=-1, keepdims=True)
    ids2 = jax.random.randint(k6, (B2,), 0, 32, dtype=jnp.int32)

    loss2 = jax.block_until_ready(
        spu_relevance_loss(img2, txt2, ids2, tm=128, tn=128))   # grid (2, 2)
    ref2 = _reference_loss(img2.astype(jnp.bfloat16).astype(jnp.float32),
                           txt2.astype(jnp.bfloat16).astype(jnp.float32), ids2)
    assert jnp.allclose(loss2, ref2, rtol=1e-3, atol=1e-4), (loss2, ref2)

    # --- 3) non-divisible batch (200 -> padded 256): interior + boundary
    #        tiles in the same grid, bf16 path. ---
    B3, D3 = 200, 64
    k7, k8, k9 = jax.random.split(jax.random.PRNGKey(2), 3)
    img3 = jax.random.normal(k7, (B3, D3), jnp.float32)
    txt3 = jax.random.normal(k8, (B3, D3), jnp.float32)
    img3 = img3 / jnp.linalg.norm(img3, axis=-1, keepdims=True)
    txt3 = txt3 / jnp.linalg.norm(txt3, axis=-1, keepdims=True)
    ids3 = jax.random.randint(k9, (B3,), 0, 16, dtype=jnp.int32)

    loss3 = jax.block_until_ready(
        spu_relevance_loss(img3, txt3, ids3, tm=128, tn=128))
    ref3 = _reference_loss(img3.astype(jnp.bfloat16).astype(jnp.float32),
                           txt3.astype(jnp.bfloat16).astype(jnp.float32), ids3)
    assert jnp.allclose(loss3, ref3, rtol=1e-3, atol=1e-4), (loss3, ref3)

    # TODO(synk): enqueue_dequeue / XBM memory-bank branch and tb_tools logging
    # are dead (commented-out) code in the reference forward, so they are
    # intentionally not implemented.
    print("KERNEL_OK")
</pallas_src>

<mosaic_0001>
module attributes {stable_mosaic.version = 11 : i64} {
  func.func @_spu_loss_kernel(%arg0: i32, %arg1: i32, %arg2: memref<128x128xf32, #tpu.memory_space<vmem>>, %arg3: memref<128x128xf32, #tpu.memory_space<vmem>>, %arg4: memref<128x1xi32, #tpu.memory_space<vmem>>, %arg5: memref<1x128xi32, #tpu.memory_space<vmem>>, %arg6: memref<8x128xf32, #tpu.memory_space<vmem>>) attributes {dimension_semantics = [#tpu.dimension_semantics<parallel>, #tpu.dimension_semantics<arbitrary>], iteration_bounds = array<i64: 1, 1>, scalar_prefetch = 0 : i64, scratch_operands = 0 : i64, tpu.core_type = #tpu.core_type<tc>, window_params = [{transform_indices = @transform_0, window_bounds = array<i64: 128, 128>}, {transform_indices = @transform_1, window_bounds = array<i64: 128, 128>}, {transform_indices = @transform_2, window_bounds = array<i64: 128, 1>}, {transform_indices = @transform_3, window_bounds = array<i64: 1, 128>}, {transform_indices = @transform_4, window_bounds = array<i64: 8, 128>}]} {
    %c0_i32 = arith.constant 0 : i32
    %0 = arith.cmpi eq, %arg1, %c0_i32 : i32
    %1 = arith.extui %0 : i1 to i32
    %c0_i32_0 = arith.constant 0 : i32
    %2 = arith.cmpi ne, %1, %c0_i32_0 : i32
    scf.if %2 {
      %cst_18 = arith.constant 0.000000e+00 : f32
      %36 = vector.broadcast %cst_18 : f32 to vector<8x128xf32>
      %c0_19 = arith.constant 0 : index
      %c0_20 = arith.constant 0 : index
      %37 = vector.load %arg6[%c0_19, %c0_20] : memref<8x128xf32, #tpu.memory_space<vmem>>, vector<8x128xf32>
      tpu.vector_store %arg6[%c0_19, %c0_20], %36 {strides = array<i32>} : memref<8x128xf32, #tpu.memory_space<vmem>>, vector<8x128xf32>,
    } else {
    }
    %c0 = arith.constant 0 : index
    %c0_1 = arith.constant 0 : index
    %3 = vector.load %arg2[%c0, %c0_1] : memref<128x128xf32, #tpu.memory_space<vmem>>, vector<128x128xf32>
    %c0_2 = arith.constant 0 : index
    %c0_3 = arith.constant 0 : index
    %4 = vector.load %arg3[%c0_2, %c0_3] : memref<128x128xf32, #tpu.memory_space<vmem>>, vector<128x128xf32>
    %cst = arith.constant dense<0.000000e+00> : vector<128x128xf32>
    %5 = tpu.matmul %3, %4, %cst {dimension_numbers = #tpu.dot_dimension_numbers<[1], [0], [0], [1], [0, 0, 1, 1], [], []>} : vector<128x128xf32>, vector<128x128xf32>, vector<128x128xf32> -> vector<128x128xf32>
    %cst_4 = arith.constant 2.000000e+01 : f32
    %6 = vector.broadcast %cst_4 : f32 to vector<128x128xf32>
    %7 = arith.mulf %5, %6 : vector<128x128xf32>
    %c0_5 = arith.constant 0 : index
    %c0_6 = arith.constant 0 : index
    %8 = vector.load %arg4[%c0_5, %c0_6] : memref<128x1xi32, #tpu.memory_space<vmem>>, vector<128x1xi32>
    %c0_7 = arith.constant 0 : index
    %c0_8 = arith.constant 0 : index
    %9 = vector.load %arg5[%c0_7, %c0_8] : memref<1x128xi32, #tpu.memory_space<vmem>>, vector<1x128xi32>
    %10 = vector.broadcast %8 : vector<128x1xi32> to vector<128x128xi32>
    %11 = vector.broadcast %9 : vector<1x128xi32> to vector<128x128xi32>
    %12 = arith.cmpi eq, %10, %11 : vector<128x128xi32>
    %cst_9 = arith.constant 0.000000e+00 : f32
    %13 = vector.broadcast %cst_9 : f32 to vector<128x128xf32>
    %14 = arith.maximumf %7, %13 : vector<128x128xf32>
    %cst_10 = arith.constant 0.000000e+00 : f32
    %15 = vector.broadcast %cst_10 : f32 to vector<128x128xf32>
    %16 = arith.select %12, %7, %15 : vector<128x128xi1>, vector<128x128xf32>
    %17 = arith.subf %14, %16 : vector<128x128xf32>
    %18 = math.absf %7 : vector<128x128xf32>
    %cst_11 = arith.constant 0.000000e+00 : f32
    %19 = vector.broadcast %cst_11 : f32 to vector<128x128xf32>
    %20 = arith.subf %19, %18 : vector<128x128xf32>
    %21 = math.exp %20 : vector<128x128xf32>
    %22 = math.log1p %21 : vector<128x128xf32>
    %23 = arith.addf %17, %22 : vector<128x128xf32>
    %c128_i32 = arith.constant 128 : i32
    %24 = arith.muli %arg0, %c128_i32 : i32
    %c128_i32_12 = arith.constant 128 : i32
    %25 = arith.muli %arg1, %c128_i32_12 : i32
    %c128_i32_13 = arith.constant 128 : i32
    %26 = arith.addi %24, %c128_i32_13 : i32
    %c8_i32 = arith.constant 8 : i32
    %27 = arith.cmpi sgt, %26, %c8_i32 : i32
    %c128_i32_14 = arith.constant 128 : i32
    %28 = arith.addi %25, %c128_i32_14 : i32
    %c8_i32_15 = arith.constant 8 : i32
    %29 = arith.cmpi sgt, %28, %c8_i32_15 : i32
    %30 = arith.ori %27, %29 : i1
    %true = arith.constant true
    %31 = arith.xori %30, %true : i1
    %32 = arith.extui %31 : i1 to i32
    %c0_i32_16 = arith.constant 0 : i32
    %33 = arith.cmpi ne, %32, %c0_i32_16 : i32
    scf.if %33 {
      %c0_18 = arith.constant 0 : index
      %c0_19 = arith.constant 0 : index
      %36 = vector.load %arg6[%c0_18, %c0_19] : memref<8x128xf32, #tpu.memory_space<vmem>>, vector<8x128xf32>
      %37 = vector.shape_cast %23 : vector<128x128xf32> to vector<16x8x128xf32>
      %cst_20 = arith.constant dense<0.000000e+00> : vector<8x128xf32>
      %38 = vector.multi_reduction <add>, %37, %cst_20 [0] : vector<16x8x128xf32> to vector<8x128xf32>
      %39 = arith.addf %36, %38 : vector<8x128xf32>
      %c0_21 = arith.constant 0 : index
      %c0_22 = arith.constant 0 : index
      %40 = vector.load %arg6[%c0_21, %c0_22] : memref<8x128xf32, #tpu.memory_space<vmem>>, vector<8x128xf32>
      tpu.vector_store %arg6[%c0_21, %c0_22], %39 {strides = array<i32>} : memref<8x128xf32, #tpu.memory_space<vmem>>, vector<8x128xf32>,
    } else {
    }
    %34 = arith.extui %30 : i1 to i32
    %c0_i32_17 = arith.constant 0 : i32
    %35 = arith.cmpi ne, %34, %c0_i32_17 : i32
    scf.if %35 {
      %36 = tpu.iota {dimensions = array<i32: 0>} : vector<128x128xi32>
      %37 = vector.broadcast %24 : i32 to vector<128x128xi32>
      %38 = arith.addi %37, %36 : vector<128x128xi32>
      %39 = tpu.iota {dimensions = array<i32: 1>} : vector<128x128xi32>
      %40 = vector.broadcast %25 : i32 to vector<128x128xi32>
      %41 = arith.addi %40, %39 : vector<128x128xi32>
      %c8_i32_18 = arith.constant 8 : i32
      %42 = vector.broadcast %c8_i32_18 : i32 to vector<128x128xi32>
      %43 = arith.cmpi slt, %38, %42 : vector<128x128xi32>
      %c8_i32_19 = arith.constant 8 : i32
      %44 = vector.broadcast %c8_i32_19 : i32 to vector<128x128xi32>
      %45 = arith.cmpi slt, %41, %44 : vector<128x128xi32>
      %46 = arith.andi %43, %45 : vector<128x128xi1>
      %c0_20 = arith.constant 0 : index
      %c0_21 = arith.constant 0 : index
      %47 = vector.load %arg6[%c0_20, %c0_21] : memref<8x128xf32, #tpu.memory_space<vmem>>, vector<8x128xf32>
      %cst_22 = arith.constant 0.000000e+00 : f32
      %48 = vector.broadcast %cst_22 : f32 to vector<128x128xf32>
      %49 = arith.select %46, %23, %48 : vector<128x128xi1>, vector<128x128xf32>
      %50 = vector.shape_cast %49 : vector<128x128xf32> to vector<16x8x128xf32>
      %cst_23 = arith.constant dense<0.000000e+00> : vector<8x128xf32>
      %51 = vector.multi_reduction <add>, %50, %cst_23 [0] : vector<16x8x128xf32> to vector<8x128xf32>
      %52 = arith.addf %47, %51 : vector<8x128xf32>
      %c0_24 = arith.constant 0 : index
      %c0_25 = arith.constant 0 : index
      %53 = vector.load %arg6[%c0_24, %c0_25] : memref<8x128xf32, #tpu.memory_space<vmem>>, vector<8x128xf32>
      tpu.vector_store %arg6[%c0_24, %c0_25], %52 {strides = array<i32>} : memref<8x128xf32, #tpu.memory_space<vmem>>, vector<8x128xf32>,
    } else {
    }
    return
  }
  func.func @transform_0(%arg0: i32, %arg1: i32) -> (i32, i32) {
    %c0_i32 = arith.constant 0 : i32
    %c0_i32_0 = arith.constant 0 : i32
    return %arg0, %c0_i32 : i32, i32
  }
  func.func @transform_1(%arg0: i32, %arg1: i32) -> (i32, i32) {
    %c0_i32 = arith.constant 0 : i32
    %c0_i32_0 = arith.constant 0 : i32
    return %c0_i32, %arg1 : i32, i32
  }
  func.func @transform_2(%arg0: i32, %arg1: i32) -> (i32, i32) {
    %c0_i32 = arith.constant 0 : i32
    %c0_i32_0 = arith.constant 0 : i32
    return %arg0, %c0_i32 : i32, i32
  }
  func.func @transform_3(%arg0: i32, %arg1: i32) -> (i32, i32) {
    %c0_i32 = arith.constant 0 : i32
    %c0_i32_0 = arith.constant 0 : i32
    return %c0_i32, %arg1 : i32, i32
  }
  func.func @transform_4(%arg0: i32, %arg1: i32) -> (i32, i32) {
    %c0_i32 = arith.constant 0 : i32
    %c0_i32_0 = arith.constant 0 : i32
    return %arg0, %c0_i32 : i32, i32
  }
}

</mosaic_0001>

<llo_original>
// kernel: tpu_custom_call.1
$region0: #{tpu_custom_call.1}
  #allocation0 [shape = 'u32[]', space=smem, size = 0x4, offset = 0x4, fixed_abs, tag = 'smem constant byte address 0x4 - core index']
  #allocation1 [shape = 'u32[144,128]{1,0:T(1,128)}', space=vmem, size = 0x12000, scoped, tag = 'internal scratch']
  %s0 = inlined_call_operand.vmem [shape: f32[128,128], index: 0, kind: input, shape index: {}]
  %s1 = inlined_call_operand.hbm [shape: f32[128,128], index: 1, kind: input, shape index: {}]
  %s2 = inlined_call_operand.vmem [shape: s32[128,1], index: 2, kind: input, shape index: {}]
  %s3 = inlined_call_operand.vmem [shape: s32[1,128], index: 3, kind: input, shape index: {}]
  %s4 = inlined_call_operand.hbm [shape: f32[8,128], index: 4, kind: output, shape index: {}]
  %s5 = sld [smem:[#allocation0]]
  $region42: #{tpu_custom_call.1} parent=0
    _
  %s7 = ssub.s32 1, %s5
  %s8 = scalar_select 0, %s7, %s5
  $region1: #{tpu_custom_call.1} parent=0
    #allocation2 [shape = 'u8[65536]{0}', space=vmem, size = 0x10000, scoped, tag = 'input window, operand 1, single buffered']
    #allocation3 [shape = 's32[1]{0}', space=sflag, size = 0x4, scoped, tag = 'scoped memory for tpu_custom_call.1']
    #allocation4 [shape = 's32[1]{0}', space=sflag, size = 0x4, scoped, tag = 'scoped memory for tpu_custom_call.1']
    #allocation5 [shape = 'u8[4096]{0}', space=vmem, size = 0x1000, scoped, tag = 'output window, operand 0, single buffered']
    %9 = vsyncpa [#allocation3], 0
    %10 = vsyncpa [#allocation4], 0
    // Predicated region
    $region2: #{tpu_custom_call.1} parent=1 // pred_check
      _
    $region3: #{tpu_custom_call.1} parent=1 // pred_check_branch
      %12 = sbr.rel (0) target = $region5
    $region4: #{tpu_custom_call.1} parent=1 // pred_region
      _
    $region5: #{tpu_custom_call.1} parent=1 // pred_fallthru
      _
    // Predicated region
    $region6: #{tpu_custom_call.1} parent=1 // pred_check
      _
    $region7: #{tpu_custom_call.1} parent=1 // pred_check_branch
      %14 = sbr.rel (0) target = $region9
    $region8: #{tpu_custom_call.1} parent=1 // pred_region
      %s16 = ssub.s32 2048, 2048
      %17 = vsyncadd [#allocation3], %s16
      %s18 = sshll.u32 [#allocation2], 4
      %s19 = int_to_ptr.vmem [resolvable:$true] %s18
      %24 = dma.hbm_to_vmem [thread:$0]  %s1, 2048, %s19, [#allocation3], 128, 128, 8
    $region9: #{tpu_custom_call.1} parent=1 // pred_fallthru
      _
    // Predicated region
    $region10: #{tpu_custom_call.1} parent=1 // pred_check
      _
    $region11: #{tpu_custom_call.1} parent=1 // pred_check_branch
      %26 = sbr.rel (0) target = $region13
    $region12: #{tpu_custom_call.1} parent=1 // pred_region
      _
    $region13: #{tpu_custom_call.1} parent=1 // pred_fallthru
      _
    // Predicated region
    $region14: #{tpu_custom_call.1} parent=1 // pred_check
      _
    $region15: #{tpu_custom_call.1} parent=1 // pred_check_branch
      %28 = sbr.rel (0) target = $region17
    $region16: #{tpu_custom_call.1} parent=1 // pred_region
      _
    $region17: #{tpu_custom_call.1} parent=1 // pred_fallthru
      _
    // Predicated region
    $region18: #{tpu_custom_call.1} parent=1 // pred_check
      _
    $region19: #{tpu_custom_call.1} parent=1 // pred_check_branch
      %30 = sbr.rel (0) target = $region21
    $region20: #{tpu_custom_call.1} parent=1 // pred_region
      %31 = dma.done [#allocation3], 2048
    $region21: #{tpu_custom_call.1} parent=1 // pred_fallthru
      _
    %p32 = scmp.eq.s32.totalorder 0, 0
    // Predicated region
    $region22: #{tpu_custom_call.1} parent=1 // pred_check
      %p33 = pneg %p32
    $region23: #{tpu_custom_call.1} parent=1 // pred_check_branch
      %35 = sbr.rel (%p33) target = $region25
    $region24: #{tpu_custom_call.1} parent=1 // pred_region
      %36 = vst [vmem:[#allocation5] sm:$0xff] 0.0
    $region25: #{tpu_custom_call.1} parent=1 // pred_fallthru
      _
    %v37 = vld [vmem:[%s0] sm:$0xff]
    %v38 = vld [vmem:[%s0 + $0x8] sm:$0xff]
    %v39 = vld [vmem:[%s0 + $0x10] sm:$0xff]
    %v40 = vld [vmem:[%s0 + $0x18] sm:$0xff]
    %v41 = vld [vmem:[%s0 + $0x20] sm:$0xff]
    %v42 = vld [vmem:[%s0 + $0x28] sm:$0xff]
    %v43 = vld [vmem:[%s0 + $0x30] sm:$0xff]
    %v44 = vld [vmem:[%s0 + $0x38] sm:$0xff]
    %v45 = vld [vmem:[%s0 + $0x40] sm:$0xff]
    %v46 = vld [vmem:[%s0 + $0x48] sm:$0xff]
    %v47 = vld [vmem:[%s0 + $0x50] sm:$0xff]
    %v48 = vld [vmem:[%s0 + $0x58] sm:$0xff]
    %v49 = vld [vmem:[%s0 + $0x60] sm:$0xff]
    %v50 = vld [vmem:[%s0 + $0x68] sm:$0xff]
    %v51 = vld [vmem:[%s0 + $0x70] sm:$0xff]
    %v52 = vld [vmem:[%s0 + $0x78] sm:$0xff]
    %v53 = vld [vmem:[#allocation2] sm:$0xff]
    %v54 = vld [vmem:[#allocation2 + $0x8] sm:$0xff]
    %v55 = vld [vmem:[#allocation2 + $0x10] sm:$0xff]
    %v56 = vld [vmem:[#allocation2 + $0x18] sm:$0xff]
    %v57 = vld [vmem:[#allocation2 + $0x20] sm:$0xff]
    %v58 = vld [vmem:[#allocation2 + $0x28] sm:$0xff]
    %v59 = vld [vmem:[#allocation2 + $0x30] sm:$0xff]
    %v60 = vld [vmem:[#allocation2 + $0x38] sm:$0xff]
    %v61 = vld [vmem:[#allocation2 + $0x40] sm:$0xff]
    %v62 = vld [vmem:[#allocation2 + $0x48] sm:$0xff]
    %v63 = vld [vmem:[#allocation2 + $0x50] sm:$0xff]
    %v64 = vld [vmem:[#allocation2 + $0x58] sm:$0xff]
    %v65 = vld [vmem:[#allocation2 + $0x60] sm:$0xff]
    %v66 = vld [vmem:[#allocation2 + $0x68] sm:$0xff]
    %v67 = vld [vmem:[#allocation2 + $0x70] sm:$0xff]
    %v68 = vld [vmem:[#allocation2 + $0x78] sm:$0xff]
    %69 = vmatprep.subr.mxu0 0.0
    %70 = vmatpush1.msra.mxu0 %v53
    %71 = vmatprep.subr.mxu0 0.0
    %72 = vmatpush1.msra.mxu0 %v54
    %73 = vmatprep.subr.mxu0 0.0
    %74 = vmatpush1.msra.mxu0 %v55
    %75 = vmatprep.subr.mxu0 0.0
    %76 = vmatpush1.msra.mxu0 %v56
    %77 = vmatprep.subr.mxu0 0.0
    %78 = vmatpush1.msra.mxu0 %v57
    %79 = vmatprep.subr.mxu0 0.0
    %80 = vmatpush1.msra.mxu0 %v58
    %81 = vmatprep.subr.mxu0 0.0
    %82 = vmatpush1.msra.mxu0 %v59
    %83 = vmatprep.subr.mxu0 0.0
    %84 = vmatpush1.msra.mxu0 %v60
    %85 = vmatprep.subr.mxu0 0.0
    %86 = vmatpush1.msra.mxu0 %v61
    %87 = vmatprep.subr.mxu0 0.0
    %88 = vmatpush1.msra.mxu0 %v62
    %89 = vmatprep.subr.mxu0 0.0
    %90 = vmatpush1.msra.mxu0 %v63
    %91 = vmatprep.subr.mxu0 0.0
    %92 = vmatpush1.msra.mxu0 %v64
    %93 = vmatprep.subr.mxu0 0.0
    %94 = vmatpush1.msra.mxu0 %v65
    %95 = vmatprep.subr.mxu0 0.0
    %96 = vmatpush1.msra.mxu0 %v66
    %97 = vmatprep.subr.mxu0 0.0
    %98 = vmatpush1.msra.mxu0 %v67
    %99 = vmatprep.subr.mxu0 0.0
    %100 = vmatpush1.msra.mxu0 %v68
    %101 = vmatprep.subr.mxu0 0.0
    %102 = vmatpush1.msra.mxu0 0.0
    %103 = vmatprep.subr.mxu0 0.0
    %104 = vmatpush1.msra.mxu0 0.0
    %105 = vmatprep.subr.mxu0 0.0
    %106 = vmatpush1.msra.mxu0 0.0
    %107 = vmatprep.subr.mxu0 0.0
    %108 = vmatpush1.msra.mxu0 0.0
    %109 = vmatprep.subr.mxu0 0.0
    %110 = vmatpush1.msra.mxu0 0.0
    %111 = vmatprep.subr.mxu0 0.0
    %112 = vmatpush1.msra.mxu0 0.0
    %113 = vmatprep.subr.mxu0 0.0
    %114 = vmatpush1.msra.mxu0 0.0
    %115 = vmatprep.subr.mxu0 0.0
    %116 = vmatpush1.msra.mxu0 0.0
    %117 = vmatprep.subr.mxu0 0.0
    %118 = vmatpush1.msra.mxu0 0.0
    %119 = vmatprep.subr.mxu0 0.0
    %120 = vmatpush1.msra.mxu0 0.0
    %121 = vmatprep.subr.mxu0 0.0
    %122 = vmatpush1.msra.mxu0 0.0
    %123 = vmatprep.subr.mxu0 0.0
    %124 = vmatpush1.msra.mxu0 0.0
    %125 = vmatprep.subr.mxu0 0.0
    %126 = vmatpush1.msra.mxu0 0.0
    %127 = vmatprep.subr.mxu0 0.0
    %128 = vmatpush1.msra.mxu0 0.0
    %129 = vmatprep.subr.mxu0 0.0
    %130 = vmatpush1.msra.mxu0 0.0
    %131 = vmatprep.subr.mxu0 0.0
    %132 = vmatpush1.msra.mxu0 0.0
    %133 = vmatprep.mubr.f32.mxu0 0.0
    %134 = vmatmul.mubr.f32.gmra.mrb[0].mxu0 %v37
    %v135 = vpop.f32.mrb[0].mxu0
    %v136 = vadd.f32 0.0, %v135
    %v137 = vpop.f32.mrb[0].mxu0
    %138 = vmatprep.mubr.f32.mxu0 0.0
    %139 = vmatmul.mubr.f32.gmra.mrb[0].mxu0 %v38
    %v140 = vpop.f32.mrb[0].mxu0
    %v141 = vadd.f32 0.0, %v140
    %v142 = vpop.f32.mrb[0].mxu0
    %143 = vmatprep.mubr.f32.mxu0 0.0
    %144 = vmatmul.mubr.f32.gmra.mrb[0].mxu0 %v39
    %v145 = vpop.f32.mrb[0].mxu0
    %v146 = vadd.f32 0.0, %v145
    %v147 = vpop.f32.mrb[0].mxu0
    %148 = vmatprep.mubr.f32.mxu0 0.0
    %149 = vmatmul.mubr.f32.gmra.mrb[0].mxu0 %v40
    %v150 = vpop.f32.mrb[0].mxu0
    %v151 = vadd.f32 0.0, %v150
    %v152 = vpop.f32.mrb[0].mxu0
    %153 = vmatprep.mubr.f32.mxu0 0.0
    %154 = vmatmul.mubr.f32.gmra.mrb[0].mxu0 %v41
    %v155 = vpop.f32.mrb[0].mxu0
    %v156 = vadd.f32 0.0, %v155
    %v157 = vpop.f32.mrb[0].mxu0
    %158 = vmatprep.mubr.f32.mxu0 0.0
    %159 = vmatmul.mubr.f32.gmra.mrb[0].mxu0 %v42
    %v160 = vpop.f32.mrb[0].mxu0
    %v161 = vadd.f32 0.0, %v160
    %v162 = vpop.f32.mrb[0].mxu0
    %163 = vmatprep.mubr.f32.mxu0 0.0
    %164 = vmatmul.mubr.f32.gmra.mrb[0].mxu0 %v43
    %v165 = vpop.f32.mrb[0].mxu0
    %v166 = vadd.f32 0.0, %v165
    %v167 = vpop.f32.mrb[0].mxu0
    %168 = vmatprep.mubr.f32.mxu0 0.0
    %169 = vmatmul.mubr.f32.gmra.mrb[0].mxu0 %v44
    %v170 = vpop.f32.mrb[0].mxu0
    %v171 = vadd.f32 0.0, %v170
    %v172 = vpop.f32.mrb[0].mxu0
    %173 = vmatprep.mubr.f32.mxu0 0.0
    %174 = vmatmul.mubr.f32.gmra.mrb[0].mxu0 %v45
    %v175 = vpop.f32.mrb[0].mxu0
    %v176 = vadd.f32 0.0, %v175
    %v177 = vpop.f32.mrb[0].mxu0
    %178 = vmatprep.mubr.f32.mxu0 0.0
    %179 = vmatmul.mubr.f32.gmra.mrb[0].mxu0 %v46
    %v180 = vpop.f32.mrb[0].mxu0
    %v181 = vadd.f32 0.0, %v180
    %v182 = vpop.f32.mrb[0].mxu0
    %183 = vmatprep.mubr.f32.mxu0 0.0
    %184 = vmatmul.mubr.f32.gmra.mrb[0].mxu0 %v47
    %v185 = vpop.f32.mrb[0].mxu0
    %v186 = vadd.f32 0.0, %v185
    %v187 = vpop.f32.mrb[0].mxu0
    %188 = vmatprep.mubr.f32.mxu0 0.0
    %189 = vmatmul.mubr.f32.gmra.mrb[0].mxu0 %v48
    %v190 = vpop.f32.mrb[0].mxu0
    %v191 = vadd.f32 0.0, %v190
    %v192 = vpop.f32.mrb[0].mxu0
    %193 = vmatprep.mubr.f32.mxu0 0.0
    %194 = vmatmul.mubr.f32.gmra.mrb[0].mxu0 %v49
    %v195 = vpop.f32.mrb[0].mxu0
    %v196 = vadd.f32 0.0, %v195
    %v197 = vpop.f32.mrb[0].mxu0
    %198 = vmatprep.mubr.f32.mxu0 0.0
    %199 = vmatmul.mubr.f32.gmra.mrb[0].mxu0 %v50
    %v200 = vpop.f32.mrb[0].mxu0
    %v201 = vadd.f32 0.0, %v200
    %v202 = vpop.f32.mrb[0].mxu0
    %203 = vmatprep.mubr.f32.mxu0 0.0
    %204 = vmatmul.mubr.f32.gmra.mrb[0].mxu0 %v51
    %v205 = vpop.f32.mrb[0].mxu0
    %v206 = vadd.f32 0.0, %v205
    %v207 = vpop.f32.mrb[0].mxu0
    %208 = vmatprep.mubr.f32.mxu0 0.0
    %209 = vmatmul.mubr.f32.gmra.mrb[0].mxu0 %v52
    %v210 = vpop.f32.mrb[0].mxu0
    %v211 = vadd.f32 0.0, %v210
    %v212 = vpop.f32.mrb[0].mxu0
    %213 = vdwg.mxu0
    %v214 = vmul.f32 %v136, 20.0
    %v215 = vmul.f32 %v141, 20.0
    %v216 = vmul.f32 %v146, 20.0
    %v217 = vmul.f32 %v151, 20.0
    %v218 = vmul.f32 %v156, 20.0
    %v219 = vmul.f32 %v161, 20.0
    %v220 = vmul.f32 %v166, 20.0
    %v221 = vmul.f32 %v171, 20.0
    %v222 = vmul.f32 %v176, 20.0
    %v223 = vmul.f32 %v181, 20.0
    %v224 = vmul.f32 %v186, 20.0
    %v225 = vmul.f32 %v191, 20.0
    %v226 = vmul.f32 %v196, 20.0
    %v227 = vmul.f32 %v201, 20.0
    %v228 = vmul.f32 %v206, 20.0
    %v229 = vmul.f32 %v211, 20.0
    %v230 = vld [vmem:[%s2] sm:$0xff]
    %v231 = vld [vmem:[%s2 + $0x8] sm:$0xff]
    %v232 = vld [vmem:[%s2 + $0x10] sm:$0xff]
    %v233 = vld [vmem:[%s2 + $0x18] sm:$0xff]
    %v234 = vld [vmem:[%s2 + $0x20] sm:$0xff]
    %v235 = vld [vmem:[%s2 + $0x28] sm:$0xff]
    %v236 = vld [vmem:[%s2 + $0x30] sm:$0xff]
    %v237 = vld [vmem:[%s2 + $0x38] sm:$0xff]
    %v238 = vld [vmem:[%s2 + $0x40] sm:$0xff]
    %v239 = vld [vmem:[%s2 + $0x48] sm:$0xff]
    %v240 = vld [vmem:[%s2 + $0x50] sm:$0xff]
    %v241 = vld [vmem:[%s2 + $0x58] sm:$0xff]
    %v242 = vld [vmem:[%s2 + $0x60] sm:$0xff]
    %v243 = vld [vmem:[%s2 + $0x68] sm:$0xff]
    %v244 = vld [vmem:[%s2 + $0x70] sm:$0xff]
    %v245 = vld [vmem:[%s2 + $0x78] sm:$0xff]
    %v246 = vld [vmem:[%s3] sm:$0x1]
    %247 = vset.pattern.permute.xlu0 0
    %248 = vperm.xlu0 %247, %v230
    %v249 = vpop.permute.xlu0 %248
    %250 = vset.pattern.permute.xlu0 0
    %251 = vperm.xlu0 %250, %v231
    %v252 = vpop.permute.xlu0 %251
    %253 = vset.pattern.permute.xlu0 0
    %254 = vperm.xlu0 %253, %v232
    %v255 = vpop.permute.xlu0 %254
    %256 = vset.pattern.permute.xlu0 0
    %257 = vperm.xlu0 %256, %v233
    %v258 = vpop.permute.xlu0 %257
    %259 = vset.pattern.permute.xlu0 0
    %260 = vperm.xlu0 %259, %v234
    %v261 = vpop.permute.xlu0 %260
    %262 = vset.pattern.permute.xlu0 0
    %263 = vperm.xlu0 %262, %v235
    %v264 = vpop.permute.xlu0 %263
    %265 = vset.pattern.permute.xlu0 0
    %266 = vperm.xlu0 %265, %v236
    %v267 = vpop.permute.xlu0 %266
    %268 = vset.pattern.permute.xlu0 0
    %269 = vperm.xlu0 %268, %v237
    %v270 = vpop.permute.xlu0 %269
    %271 = vset.pattern.permute.xlu0 0
    %272 = vperm.xlu0 %271, %v238
    %v273 = vpop.permute.xlu0 %272
    %274 = vset.pattern.permute.xlu0 0
    %275 = vperm.xlu0 %274, %v239
    %v276 = vpop.permute.xlu0 %275
    %277 = vset.pattern.permute.xlu0 0
    %278 = vperm.xlu0 %277, %v240
    %v279 = vpop.permute.xlu0 %278
    %280 = vset.pattern.permute.xlu0 0
    %281 = vperm.xlu0 %280, %v241
    %v282 = vpop.permute.xlu0 %281
    %283 = vset.pattern.permute.xlu0 0
    %284 = vperm.xlu0 %283, %v242
    %v285 = vpop.permute.xlu0 %284
    %286 = vset.pattern.permute.xlu0 0
    %287 = vperm.xlu0 %286, %v243
    %v288 = vpop.permute.xlu0 %287
    %289 = vset.pattern.permute.xlu0 0
    %290 = vperm.xlu0 %289, %v244
    %v291 = vpop.permute.xlu0 %290
    %292 = vset.pattern.permute.xlu0 0
    %293 = vperm.xlu0 %292, %v245
    %v294 = vpop.permute.xlu0 %293
    %v295 = vlaneseq
    %v296 = vshrl.u32 %v295, 7
    %v297 = vsub.s32 0, %v296
    %v298 = vrot.slane %v246, %v297
    %vm299 = vcmp.eq.s32.totalorder %v249, %v298
    %vm300 = vcmp.eq.s32.totalorder %v252, %v298
    %vm301 = vcmp.eq.s32.totalorder %v255, %v298
    %vm302 = vcmp.eq.s32.totalorder %v258, %v298
    %vm303 = vcmp.eq.s32.totalorder %v261, %v298
    %vm304 = vcmp.eq.s32.totalorder %v264, %v298
    %vm305 = vcmp.eq.s32.totalorder %v267, %v298
    %vm306 = vcmp.eq.s32.totalorder %v270, %v298
    %vm307 = vcmp.eq.s32.totalorder %v273, %v298
    %vm308 = vcmp.eq.s32.totalorder %v276, %v298
    %vm309 = vcmp.eq.s32.totalorder %v279, %v298
    %vm310 = vcmp.eq.s32.totalorder %v282, %v298
    %vm311 = vcmp.eq.s32.totalorder %v285, %v298
    %vm312 = vcmp.eq.s32.totalorder %v288, %v298
    %vm313 = vcmp.eq.s32.totalorder %v291, %v298
    %vm314 = vcmp.eq.s32.totalorder %v294, %v298
    %v315 = vmax.f32 %v214, 0.0
    %v316 = vmax.f32 %v215, 0.0
    %v317 = vmax.f32 %v216, 0.0
    %v318 = vmax.f32 %v217, 0.0
    %v319 = vmax.f32 %v218, 0.0
    %v320 = vmax.f32 %v219, 0.0
    %v321 = vmax.f32 %v220, 0.0
    %v322 = vmax.f32 %v221, 0.0
    %v323 = vmax.f32 %v222, 0.0
    %v324 = vmax.f32 %v223, 0.0
    %v325 = vmax.f32 %v224, 0.0
    %v326 = vmax.f32 %v225, 0.0
    %v327 = vmax.f32 %v226, 0.0
    %v328 = vmax.f32 %v227, 0.0
    %v329 = vmax.f32 %v228, 0.0
    %v330 = vmax.f32 %v229, 0.0
    %v331 = vsel %vm299, %v214, 0.0
    %v332 = vsel %vm300, %v215, 0.0
    %v333 = vsel %vm301, %v216, 0.0
    %v334 = vsel %vm302, %v217, 0.0
    %v335 = vsel %vm303, %v218, 0.0
    %v336 = vsel %vm304, %v219, 0.0
    %v337 = vsel %vm305, %v220, 0.0
    %v338 = vsel %vm306, %v221, 0.0
    %v339 = vsel %vm307, %v222, 0.0
    %v340 = vsel %vm308, %v223, 0.0
    %v341 = vsel %vm309, %v224, 0.0
    %v342 = vsel %vm310, %v225, 0.0
    %v343 = vsel %vm311, %v226, 0.0
    %v344 = vsel %vm312, %v227, 0.0
    %v345 = vsel %vm313, %v228, 0.0
    %v346 = vsel %vm314, %v229, 0.0
    %v347 = vsub.f32 %v315, %v331
    %v348 = vsub.f32 %v316, %v332
    %v349 = vsub.f32 %v317, %v333
    %v350 = vsub.f32 %v318, %v334
    %v351 = vsub.f32 %v319, %v335
    %v352 = vsub.f32 %v320, %v336
    %v353 = vsub.f32 %v321, %v337
    %v354 = vsub.f32 %v322, %v338
    %v355 = vsub.f32 %v323, %v339
    %v356 = vsub.f32 %v324, %v340
    %v357 = vsub.f32 %v325, %v341
    %v358 = vsub.f32 %v326, %v342
    %v359 = vsub.f32 %v327, %v343
    %v360 = vsub.f32 %v328, %v344
    %v361 = vsub.f32 %v329, %v345
    %v362 = vsub.f32 %v330, %v346
    %v363 = vand.u32 2147483647, %v214
    %v364 = vand.u32 2147483647, %v215
    %v365 = vand.u32 2147483647, %v216
    %v366 = vand.u32 2147483647, %v217
    %v367 = vand.u32 2147483647, %v218
    %v368 = vand.u32 2147483647, %v219
    %v369 = vand.u32 2147483647, %v220
    %v370 = vand.u32 2147483647, %v221
    %v371 = vand.u32 2147483647, %v222
    %v372 = vand.u32 2147483647, %v223
    %v373 = vand.u32 2147483647, %v224
    %v374 = vand.u32 2147483647, %v225
    %v375 = vand.u32 2147483647, %v226
    %v376 = vand.u32 2147483647, %v227
    %v377 = vand.u32 2147483647, %v228
    %v378 = vand.u32 2147483647, %v229
    %v379 = vsub.f32 0.0, %v363
    %v380 = vsub.f32 0.0, %v364
    %v381 = vsub.f32 0.0, %v365
    %v382 = vsub.f32 0.0, %v366
    %v383 = vsub.f32 0.0, %v367
    %v384 = vsub.f32 0.0, %v368
    %v385 = vsub.f32 0.0, %v369
    %v386 = vsub.f32 0.0, %v370
    %v387 = vsub.f32 0.0, %v371
    %v388 = vsub.f32 0.0, %v372
    %v389 = vsub.f32 0.0, %v373
    %v390 = vsub.f32 0.0, %v374
    %v391 = vsub.f32 0.0, %v375
    %v392 = vsub.f32 0.0, %v376
    %v393 = vsub.f32 0.0, %v377
    %v394 = vsub.f32 0.0, %v378
    %v395 = vmul.f32 %v379, 1.442695
    %v396 = vpow.pop %v395
    %v397 = vmul.f32 %v380, 1.442695
    %v398 = vpow.pop %v397
    %v399 = vmul.f32 %v381, 1.442695
    %v400 = vpow.pop %v399
    %v401 = vmul.f32 %v382, 1.442695
    %v402 = vpow.pop %v401
    %v403 = vmul.f32 %v383, 1.442695
    %v404 = vpow.pop %v403
    %v405 = vmul.f32 %v384, 1.442695
    %v406 = vpow.pop %v405
    %v407 = vmul.f32 %v385, 1.442695
    %v408 = vpow.pop %v407
    %v409 = vmul.f32 %v386, 1.442695
    %v410 = vpow.pop %v409
    %v411 = vmul.f32 %v387, 1.442695
    %v412 = vpow.pop %v411
    %v413 = vmul.f32 %v388, 1.442695
    %v414 = vpow.pop %v413
    %v415 = vmul.f32 %v389, 1.442695
    %v416 = vpow.pop %v415
    %v417 = vmul.f32 %v390, 1.442695
    %v418 = vpow.pop %v417
    %v419 = vmul.f32 %v391, 1.442695
    %v420 = vpow.pop %v419
    %v421 = vmul.f32 %v392, 1.442695
    %v422 = vpow.pop %v421
    %v423 = vmul.f32 %v393, 1.442695
    %v424 = vpow.pop %v423
    %v425 = vmul.f32 %v394, 1.442695
    %v426 = vpow.pop %v425
    %v427 = vadd.f32 %v396, 1.0
    %v428 = vlog2.pop %v427
    %v429 = vmul.f32 %v428, 0.6931472
    %v430 = vmul.f32 -0.5, %v396
    %v431 = vadd.f32 %v430, 1.0
    %v432 = vmul.f32 %v431, %v396
    %v433 = vand.u32 2147483647, %v396
    %vm434 = vcmp.lt.f32.partialorder %v433, 0.0004427343
    %v435 = vsel %vm434, %v432, %v429
    %v436 = vadd.f32 %v398, 1.0
    %v437 = vlog2.pop %v436
    %v438 = vmul.f32 %v437, 0.6931472
    %v439 = vmul.f32 -0.5, %v398
    %v440 = vadd.f32 %v439, 1.0
    %v441 = vmul.f32 %v440, %v398
    %v442 = vand.u32 2147483647, %v398
    %vm443 = vcmp.lt.f32.partialorder %v442, 0.0004427343
    %v444 = vsel %vm443, %v441, %v438
    %v445 = vadd.f32 %v400, 1.0
    %v446 = vlog2.pop %v445
    %v447 = vmul.f32 %v446, 0.6931472
    %v448 = vmul.f32 -0.5, %v400
    %v449 = vadd.f32 %v448, 1.0
    %v450 = vmul.f32 %v449, %v400
    %v451 = vand.u32 2147483647, %v400
    %vm452 = vcmp.lt.f32.partialorder %v451, 0.0004427343
    %v453 = vsel %vm452, %v450, %v447
    %v454 = vadd.f32 %v402, 1.0
    %v455 = vlog2.pop %v454
    %v456 = vmul.f32 %v455, 0.6931472
    %v457 = vmul.f32 -0.5, %v402
    %v458 = vadd.f32 %v457, 1.0
    %v459 = vmul.f32 %v458, %v402
    %v460 = vand.u32 2147483647, %v402
    %vm461 = vcmp.lt.f32.partialorder %v460, 0.0004427343
    %v462 = vsel %vm461, %v459, %v456
    %v463 = vadd.f32 %v404, 1.0
    %v464 = vlog2.pop %v463
    %v465 = vmul.f32 %v464, 0.6931472
    %v466 = vmul.f32 -0.5, %v404
    %v467 = vadd.f32 %v466, 1.0
    %v468 = vmul.f32 %v467, %v404
    %v469 = vand.u32 2147483647, %v404
    %vm470 = vcmp.lt.f32.partialorder %v469, 0.0004427343
    %v471 = vsel %vm470, %v468, %v465
    %v472 = vadd.f32 %v406, 1.0
    %v473 = vlog2.pop %v472
    %v474 = vmul.f32 %v473, 0.6931472
    %v475 = vmul.f32 -0.5, %v406
    %v476 = vadd.f32 %v475, 1.0
    %v477 = vmul.f32 %v476, %v406
    %v478 = vand.u32 2147483647, %v406
    %vm479 = vcmp.lt.f32.partialorder %v478, 0.0004427343
    %v480 = vsel %vm479, %v477, %v474
    %v481 = vadd.f32 %v408, 1.0
    %v482 = vlog2.pop %v481
    %v483 = vmul.f32 %v482, 0.6931472
    %v484 = vmul.f32 -0.5, %v408
    %v485 = vadd.f32 %v484, 1.0
    %v486 = vmul.f32 %v485, %v408
    %v487 = vand.u32 2147483647, %v408
    %vm488 = vcmp.lt.f32.partialorder %v487, 0.0004427343
    %v489 = vsel %vm488, %v486, %v483
    %v490 = vadd.f32 %v410, 1.0
    %v491 = vlog2.pop %v490
    %v492 = vmul.f32 %v491, 0.6931472
    %v493 = vmul.f32 -0.5, %v410
    %v494 = vadd.f32 %v493, 1.0
    %v495 = vmul.f32 %v494, %v410
    %v496 = vand.u32 2147483647, %v410
    %vm497 = vcmp.lt.f32.partialorder %v496, 0.0004427343
    %v498 = vsel %vm497, %v495, %v492
    %v499 = vadd.f32 %v412, 1.0
    %v500 = vlog2.pop %v499
    %v501 = vmul.f32 %v500, 0.6931472
    %v502 = vmul.f32 -0.5, %v412
    %v503 = vadd.f32 %v502, 1.0
    %v504 = vmul.f32 %v503, %v412
    %v505 = vand.u32 2147483647, %v412
    %vm506 = vcmp.lt.f32.partialorder %v505, 0.0004427343
    %v507 = vsel %vm506, %v504, %v501
    %v508 = vadd.f32 %v414, 1.0
    %v509 = vlog2.pop %v508
    %v510 = vmul.f32 %v509, 0.6931472
    %v511 = vmul.f32 -0.5, %v414
    %v512 = vadd.f32 %v511, 1.0
    %v513 = vmul.f32 %v512, %v414
    %v514 = vand.u32 2147483647, %v414
    %vm515 = vcmp.lt.f32.partialorder %v514, 0.0004427343
    %v516 = vsel %vm515, %v513, %v510
    %v517 = vadd.f32 %v416, 1.0
    %v518 = vlog2.pop %v517
    %v519 = vmul.f32 %v518, 0.6931472
    %v520 = vmul.f32 -0.5, %v416
    %v521 = vadd.f32 %v520, 1.0
    %v522 = vmul.f32 %v521, %v416
    %v523 = vand.u32 2147483647, %v416
    %vm524 = vcmp.lt.f32.partialorder %v523, 0.0004427343
    %v525 = vsel %vm524, %v522, %v519
    %v526 = vadd.f32 %v418, 1.0
    %v527 = vlog2.pop %v526
    %v528 = vmul.f32 %v527, 0.6931472
    %v529 = vmul.f32 -0.5, %v418
    %v530 = vadd.f32 %v529, 1.0
    %v531 = vmul.f32 %v530, %v418
    %v532 = vand.u32 2147483647, %v418
    %vm533 = vcmp.lt.f32.partialorder %v532, 0.0004427343
    %v534 = vsel %vm533, %v531, %v528
    %v535 = vadd.f32 %v420, 1.0
    %v536 = vlog2.pop %v535
    %v537 = vmul.f32 %v536, 0.6931472
    %v538 = vmul.f32 -0.5, %v420
    %v539 = vadd.f32 %v538, 1.0
    %v540 = vmul.f32 %v539, %v420
    %v541 = vand.u32 2147483647, %v420
    %vm542 = vcmp.lt.f32.partialorder %v541, 0.0004427343
    %v543 = vsel %vm542, %v540, %v537
    %v544 = vadd.f32 %v422, 1.0
    %v545 = vlog2.pop %v544
    %v546 = vmul.f32 %v545, 0.6931472
    %v547 = vmul.f32 -0.5, %v422
    %v548 = vadd.f32 %v547, 1.0
    %v549 = vmul.f32 %v548, %v422
    %v550 = vand.u32 2147483647, %v422
    %vm551 = vcmp.lt.f32.partialorder %v550, 0.0004427343
    %v552 = vsel %vm551, %v549, %v546
    %v553 = vadd.f32 %v424, 1.0
    %v554 = vlog2.pop %v553
    %v555 = vmul.f32 %v554, 0.6931472
    %v556 = vmul.f32 -0.5, %v424
    %v557 = vadd.f32 %v556, 1.0
    %v558 = vmul.f32 %v557, %v424
    %v559 = vand.u32 2147483647, %v424
    %vm560 = vcmp.lt.f32.partialorder %v559, 0.0004427343
    %v561 = vsel %vm560, %v558, %v555
    %v562 = vadd.f32 %v426, 1.0
    %v563 = vlog2.pop %v562
    %v564 = vmul.f32 %v563, 0.6931472
    %v565 = vmul.f32 -0.5, %v426
    %v566 = vadd.f32 %v565, 1.0
    %v567 = vmul.f32 %v566, %v426
    %v568 = vand.u32 2147483647, %v426
    %vm569 = vcmp.lt.f32.partialorder %v568, 0.0004427343
    %v570 = vsel %vm569, %v567, %v564
    %v571 = vadd.f32 %v347, %v435
    %v572 = vadd.f32 %v348, %v444
    %v573 = vadd.f32 %v349, %v453
    %v574 = vadd.f32 %v350, %v462
    %v575 = vadd.f32 %v351, %v471
    %v576 = vadd.f32 %v352, %v480
    %v577 = vadd.f32 %v353, %v489
    %v578 = vadd.f32 %v354, %v498
    %v579 = vadd.f32 %v355, %v507
    %v580 = vadd.f32 %v356, %v516
    %v581 = vadd.f32 %v357, %v525
    %v582 = vadd.f32 %v358, %v534
    %v583 = vadd.f32 %v359, %v543
    %v584 = vadd.f32 %v360, %v552
    %v585 = vadd.f32 %v361, %v561
    %v586 = vadd.f32 %v362, %v570
    %s587 = smul.u32 0, 128
    %s588 = smul.u32 0, 128
    %s589 = sadd.s32 %s587, 128
    %p590 = scmp.gt.s32.totalorder %s589, 8
    %s591 = sadd.s32 %s588, 128
    %p592 = scmp.gt.s32.totalorder %s591, 8
    %p593 = por %p590, %p592
    // Predicated region
    $region26: #{tpu_custom_call.1} parent=1 // pred_check
      %p594 = pneg %p593
    $region27: #{tpu_custom_call.1} parent=1 // pred_check_branch
      %596 = sbr.rel (%p594) target = $region29
    $region28: #{tpu_custom_call.1} parent=1 // pred_region
      %v597 = vlaneseq
      %v598 = vshrl.u32 %v597, 7
      %v599 = vadd.s32 %v598, 8
      %v600 = vadd.s32 %v598, 16
      %v601 = vadd.s32 %v598, 24
      %v602 = vadd.s32 %v598, 32
      %v603 = vadd.s32 %v598, 40
      %v604 = vadd.s32 %v598, 48
      %v605 = vadd.s32 %v598, 56
      %v606 = vadd.s32 %v598, 64
      %v607 = vadd.s32 %v598, 72
      %v608 = vadd.s32 %v598, 80
      %v609 = vadd.s32 %v598, 88
      %v610 = vadd.s32 %v598, 96
      %v611 = vadd.s32 %v598, 104
      %v612 = vadd.s32 %v598, 112
      %v613 = vadd.s32 %v598, 120
      %v614 = vstv %s587
      %v615 = vadd.s32 %v614, %v598
      %v616 = vadd.s32 %v614, %v599
      %v617 = vadd.s32 %v614, %v600
      %v618 = vadd.s32 %v614, %v601
      %v619 = vadd.s32 %v614, %v602
      %v620 = vadd.s32 %v614, %v603
      %v621 = vadd.s32 %v614, %v604
      %v622 = vadd.s32 %v614, %v605
      %v623 = vadd.s32 %v614, %v606
      %v624 = vadd.s32 %v614, %v607
      %v625 = vadd.s32 %v614, %v608
      %v626 = vadd.s32 %v614, %v609
      %v627 = vadd.s32 %v614, %v610
      %v628 = vadd.s32 %v614, %v611
      %v629 = vadd.s32 %v614, %v612
      %v630 = vadd.s32 %v614, %v613
      %v631 = vlaneseq
      %v632 = vand.u32 %v631, 127
      %v633 = vstv %s588
      %v634 = vadd.s32 %v633, %v632
      %vm635 = vcmp.lt.s32.totalorder %v615, 8
      %vm636 = vcmp.lt.s32.totalorder %v616, 8
      %vm637 = vcmp.lt.s32.totalorder %v617, 8
      %vm638 = vcmp.lt.s32.totalorder %v618, 8
      %vm639 = vcmp.lt.s32.totalorder %v619, 8
      %vm640 = vcmp.lt.s32.totalorder %v620, 8
      %vm641 = vcmp.lt.s32.totalorder %v621, 8
      %vm642 = vcmp.lt.s32.totalorder %v622, 8
      %vm643 = vcmp.lt.s32.totalorder %v623, 8
      %vm644 = vcmp.lt.s32.totalorder %v624, 8
      %vm645 = vcmp.lt.s32.totalorder %v625, 8
      %vm646 = vcmp.lt.s32.totalorder %v626, 8
      %vm647 = vcmp.lt.s32.totalorder %v627, 8
      %vm648 = vcmp.lt.s32.totalorder %v628, 8
      %vm649 = vcmp.lt.s32.totalorder %v629, 8
      %vm650 = vcmp.lt.s32.totalorder %v630, 8
      %vm651 = vcmp.lt.s32.totalorder %v634, 8
      %vm652 = vmand %vm635, %vm651
      %vm653 = vmand %vm636, %vm651
      %vm654 = vmand %vm637, %vm651
      %vm655 = vmand %vm638, %vm651
      %vm656 = vmand %vm639, %vm651
      %vm657 = vmand %vm640, %vm651
      %vm658 = vmand %vm641, %vm651
      %vm659 = vmand %vm642, %vm651
      %vm660 = vmand %vm643, %vm651
      %vm661 = vmand %vm644, %vm651
      %vm662 = vmand %vm645, %vm651
      %vm663 = vmand %vm646, %vm651
      %vm664 = vmand %vm647, %vm651
      %vm665 = vmand %vm648, %vm651
      %vm666 = vmand %vm649, %vm651
      %vm667 = vmand %vm650, %vm651
      %v668 = vld [vmem:[#allocation5] sm:$0xff]
      %v669 = vsel %vm652, %v571, 0.0
      %v670 = vsel %vm653, %v572, 0.0
      %v671 = vsel %vm654, %v573, 0.0
      %v672 = vsel %vm655, %v574, 0.0
      %v673 = vsel %vm656, %v575, 0.0
      %v674 = vsel %vm657, %v576, 0.0
      %v675 = vsel %vm658, %v577, 0.0
      %v676 = vsel %vm659, %v578, 0.0
      %v677 = vsel %vm660, %v579, 0.0
      %v678 = vsel %vm661, %v580, 0.0
      %v679 = vsel %vm662, %v581, 0.0
      %v680 = vsel %vm663, %v582, 0.0
      %v681 = vsel %vm664, %v583, 0.0
      %v682 = vsel %vm665, %v584, 0.0
      %v683 = vsel %vm666, %v585, 0.0
      %v684 = vsel %vm667, %v586, 0.0
      %v685 = vadd.f32 %v669, %v670
      %v686 = vadd.f32 %v685, %v671
      %v687 = vadd.f32 %v686, %v672
      %v688 = vadd.f32 %v687, %v673
      %v689 = vadd.f32 %v688, %v674
      %v690 = vadd.f32 %v689, %v675
      %v691 = vadd.f32 %v690, %v676
      %v692 = vadd.f32 %v691, %v677
      %v693 = vadd.f32 %v692, %v678
      %v694 = vadd.f32 %v693, %v679
      %v695 = vadd.f32 %v694, %v680
      %v696 = vadd.f32 %v695, %v681
      %v697 = vadd.f32 %v696, %v682
      %v698 = vadd.f32 %v697, %v683
      %v699 = vadd.f32 %v698, %v684
      %v700 = vadd.f32 %v668, %v699
      %701 = vst [vmem:[#allocation5] sm:$0xff] %v700
    $region29: #{tpu_custom_call.1} parent=1 // pred_fallthru
      _
    %p702 = pneg %p593
    // Predicated region
    $region30: #{tpu_custom_call.1} parent=1 // pred_check
      _
    $region31: #{tpu_custom_call.1} parent=1 // pred_check_branch
      %704 = sbr.rel (%p593) target = $region33
    $region32: #{tpu_custom_call.1} parent=1 // pred_region
      %v705 = vld [vmem:[#allocation5] sm:$0xff]
      %v706 = vadd.f32 %v571, %v572
      %v707 = vadd.f32 %v706, %v573
      %v708 = vadd.f32 %v707, %v574
      %v709 = vadd.f32 %v708, %v575
      %v710 = vadd.f32 %v709, %v576
      %v711 = vadd.f32 %v710, %v577
      %v712 = vadd.f32 %v711, %v578
      %v713 = vadd.f32 %v712, %v579
      %v714 = vadd.f32 %v713, %v580
      %v715 = vadd.f32 %v714, %v581
      %v716 = vadd.f32 %v715, %v582
      %v717 = vadd.f32 %v716, %v583
      %v718 = vadd.f32 %v717, %v584
      %v719 = vadd.f32 %v718, %v585
      %v720 = vadd.f32 %v719, %v586
      %v721 = vadd.f32 %v705, %v720
      %722 = vst [vmem:[#allocation5] sm:$0xff] %v721
    $region33: #{tpu_custom_call.1} parent=1 // pred_fallthru
      _
    // Predicated region
    $region34: #{tpu_custom_call.1} parent=1 // pred_check
      _
    $region35: #{tpu_custom_call.1} parent=1 // pred_check_branch
      %724 = sbr.rel (0) target = $region37
    $region36: #{tpu_custom_call.1} parent=1 // pred_region
      %s726 = ssub.s32 128, 128
      %727 = vsyncadd [#allocation4], %s726
      %s729 = sshll.u32 [#allocation5], 4
      %s730 = int_to_ptr.vmem [resolvable:$true] %s729
      %732 = dma.vmem_to_hbm [thread:$0]  %s730, 128, %s4, [#allocation4]
    $region37: #{tpu_custom_call.1} parent=1 // pred_fallthru
      _
    // Predicated region
    $region38: #{tpu_custom_call.1} parent=1 // pred_check
      _
    $region39: #{tpu_custom_call.1} parent=1 // pred_check_branch
      %734 = sbr.rel (0) target = $region41
    $region40: #{tpu_custom_call.1} parent=1 // pred_region
      %735 = dma.done [#allocation4], 128
    $region41: #{tpu_custom_call.1} parent=1 // pred_fallthru
      _
    %736 = vsyncpa [#allocation3], 1
    %737 = vsyncpa [#allocation4], 1

</llo_original>
